<compile_context>
chip_gen: v7x
topology: tpu7x:2x2x1
jax: 0.10.0
libtpu: 0.0.40
codegen_flags: <defaults>
</compile_context>

<pallas_src>
import jax
import jax.numpy as jnp
from jax.experimental import pallas as pl
from jax.experimental.pallas import tpu as pltpu

_LANES = 128
_MAX_TILE_ROWS = 4096   # (4096,128) f32 = 2 MiB/block; 2 arrays x 2 bufs = 8 MiB VMEM
_MIN_TILE_ROWS = 8      # sublane alignment


def _round_up(x, m):
    return ((x + m - 1) // m) * m


def _contrast_relu_kernel(wb_ref, dom_ref, out_ref):
    # wb_ref : SMEM (2,)        -> [w_eff = w * 1e8, b]
    # dom_ref: VMEM (TR, 128)   -> domain logits tile
    # out_ref: VMEM (TR, 128)   -> final per-sample weight tile
    w_eff = wb_ref[0]
    b = wb_ref[1]

    x = dom_ref[...]
    # |sigmoid(x) - 0.5| == 0.5 * |tanh(0.5*x)|
    # => (200 * var)**4 == (100 * tanh(0.5*x))**4 == 1e8 * tanh(0.5*x)**4
    t = jnp.tanh(0.5 * x)                      # single EUP transcendental
    t2 = t * t
    act = 0.8 + w_eff * (t2 * t2) + b
    out_ref[...] = jnp.maximum(act, b)         # torch.max(act_weight, zeros_var)


def contrast_relu_activate(dom_res, dom_label, init_weight,
                           dom_func_weight, dom_func_bias,
                           weight_scale, add_bias,
                           *, min_pallas_elems=64 * 1024, force_pallas=False):
    """Forward pass of Contrast_ReLU_activate (jittable, no host syncs).

    dom_res:         (N, 1) float32 domain-discriminator logits
    dom_label:       unused by the forward pass (signature parity)
    init_weight:     (N,) float32 -- only its shape matters (expand_as target)
    dom_func_weight: (1,) learnable parameter (ones at init)
    dom_func_bias:   (1,) non-learnable zeros
    weight_scale, add_bias: python scalars from __init__

    Returns (final_weight (N,), w_scalar 0-d, b_scalar 0-d).
    """
    del dom_label  # not used by the reference forward

    n = init_weight.shape[0]
    assert dom_res.size == n, "dom_res must squeeze to init_weight's shape"

    w_scalar = (dom_func_weight * jnp.float32(weight_scale)).reshape(()).astype(jnp.float32)
    b_scalar = (dom_func_bias + jnp.float32(add_bias)).reshape(()).astype(jnp.float32)

    x = dom_res.reshape(-1).astype(jnp.float32)
    # Folded constant: (200 * 0.5)**4 == 1e8   (FIX: was 200**4 == 1.6e9)
    w_eff = w_scalar * jnp.float32((200.0 * 0.5) ** 4)

    # Small-N fast path: fused XLA elementwise beats any Pallas dispatch here.
    if (not force_pallas) and n < min_pallas_elems:
        t = jnp.tanh(0.5 * x)
        t2 = t * t
        act = 0.8 + w_eff * (t2 * t2) + b_scalar
        final = jnp.maximum(act, b_scalar)
        return final, w_scalar, b_scalar

    # ---- lane-dense Pallas path ------------------------------------------
    rows = pl.cdiv(n, _LANES)
    n_pad = rows * _LANES
    padded = n_pad != n
    if padded:
        x = jnp.pad(x, (0, n_pad - n))        # pad only to next 128-multiple
    x2d = x.reshape(rows, _LANES)             # free bitcast when n % 128 == 0

    # Tile choice: aim for >= 4 grid steps (v7x 2-TC split + DMA/compute
    # overlap), 8-row aligned, capped at 2 MiB. Last block may be partial;
    # Pallas masks the OOB read/write.
    tile_rows = min(_MAX_TILE_ROWS,
                    max(_MIN_TILE_ROWS,
                        _round_up(pl.cdiv(rows, 4), _MIN_TILE_ROWS)))
    grid = (pl.cdiv(rows, tile_rows),)

    wb = jnp.stack([w_eff, b_scalar]).astype(jnp.float32)

    final2d = pl.pallas_call(
        _contrast_relu_kernel,
        out_shape=jax.ShapeDtypeStruct((rows, _LANES), jnp.float32),
        grid_spec=pltpu.PrefetchScalarGridSpec(
            num_scalar_prefetch=1,            # wb -> SMEM
            grid=grid,
            in_specs=[pl.BlockSpec((tile_rows, _LANES), lambda i, wb: (i, 0))],
            out_specs=pl.BlockSpec((tile_rows, _LANES), lambda i, wb: (i, 0)),
        ),
        compiler_params=pltpu.CompilerParams(
            dimension_semantics=("parallel",)),   # split across v7x's 2 TCs
    )(wb, x2d)

    final = final2d.reshape(n_pad)
    if padded:
        final = final[:n]                     # only when n % 128 != 0
    return final, w_scalar, b_scalar


def _reference(dom_res, dom_func_weight, dom_func_bias, weight_scale, add_bias):
    """Pure-JAX transcription of the PyTorch forward (sigmoid form)."""
    w = dom_func_weight[0] * weight_scale
    b = dom_func_bias[0] + add_bias
    prob = jax.nn.sigmoid(dom_res).reshape(-1)
    var = jnp.abs(prob - 0.5)
    act = 0.8 + w * (200.0 * var) ** 4 + b
    return jnp.maximum(act, b), w, b


if __name__ == "__main__":
    key = jax.random.PRNGKey(0)
    k1, k2, k3, k4, k5 = jax.random.split(key, 5)

    init_weight_scale = 0.5   # initWeightScale from __init__
    init_bias = 0.1           # initBias from __init__

    # nn.Parameter(torch.ones(1)) / Variable(torch.FloatTensor([0]))
    dom_func_weight = jnp.ones((1,), dtype=jnp.float32)
    dom_func_bias = jnp.zeros((1,), dtype=jnp.float32)

    fwd = jax.jit(
        contrast_relu_activate,
        static_argnames=("weight_scale", "add_bias",
                         "min_pallas_elems", "force_pallas"))

    # Case 1: modest discriminator batch, force the Pallas path
    # (exercises lane-dense reshape, padding 1000 -> 8x128, partial-block path).
    N1 = 1000
    dom_res1 = jax.random.normal(k1, (N1, 1), dtype=jnp.float32)
    dom_label1 = jax.random.bernoulli(k2, 0.5, (N1,)).astype(jnp.float32)
    init_weight1 = jnp.ones((N1,), dtype=jnp.float32)

    fw1, w1, b1 = fwd(dom_res1, dom_label1, init_weight1,
                      dom_func_weight, dom_func_bias,
                      weight_scale=init_weight_scale, add_bias=init_bias,
                      force_pallas=True)
    jax.block_until_ready(fw1)

    ref1, w_ref, b_ref = _reference(dom_res1, dom_func_weight, dom_func_bias,
                                    init_weight_scale, init_bias)
    assert fw1.shape == init_weight1.shape
    assert jnp.allclose(fw1, ref1, rtol=2e-4, atol=1e-4), "pallas path mismatch"
    assert abs(float(w1) - float(w_ref)) < 1e-6
    assert abs(float(b1) - float(b_ref)) < 1e-6

    # Case 2: tiny batch takes the fused jnp fast path (no Pallas dispatch).
    N2 = 8
    dom_res2 = jax.random.normal(k3, (N2, 1), dtype=jnp.float32)
    dom_label2 = jax.random.bernoulli(k4, 0.5, (N2,)).astype(jnp.float32)
    init_weight2 = jnp.ones((N2,), dtype=jnp.float32)

    fw2, w2, b2 = fwd(dom_res2, dom_label2, init_weight2,
                      dom_func_weight, dom_func_bias,
                      weight_scale=init_weight_scale, add_bias=init_bias)
    jax.block_until_ready(fw2)

    ref2, _, _ = _reference(dom_res2, dom_func_weight, dom_func_bias,
                            init_weight_scale, init_bias)
    assert fw2.shape == init_weight2.shape
    assert jnp.allclose(fw2, ref2, rtol=2e-4, atol=1e-4), "small-N path mismatch"

    # Case 3: 128-multiple batch -> no pad/slice (pure bitcast reshape) and a
    # multi-step grid (rows=16, tile=8, grid=(2,)).
    N3 = 2048
    dom_res3 = jax.random.normal(k5, (N3, 1), dtype=jnp.float32)
    dom_label3 = jnp.zeros((N3,), dtype=jnp.float32)
    init_weight3 = jnp.ones((N3,), dtype=jnp.float32)

    fw3, _, _ = fwd(dom_res3, dom_label3, init_weight3,
                    dom_func_weight, dom_func_bias,
                    weight_scale=init_weight_scale, add_bias=init_bias,
                    force_pallas=True)
    jax.block_until_ready(fw3)

    ref3, _, _ = _reference(dom_res3, dom_func_weight, dom_func_bias,
                            init_weight_scale, init_bias)
    assert fw3.shape == init_weight3.shape
    assert jnp.allclose(fw3, ref3, rtol=2e-4, atol=1e-4), "multi-block path mismatch"

    print("KERNEL_OK")
</pallas_src>

<mosaic_0001>
module attributes {stable_mosaic.version = 11 : i64} {
  func.func @_contrast_relu_kernel(%arg0: i32, %arg1: memref<2xf32, #tpu.memory_space<smem>>, %arg2: memref<8x128xf32, #tpu.memory_space<vmem>>, %arg3: memref<8x128xf32, #tpu.memory_space<vmem>>) attributes {dimension_semantics = [#tpu.dimension_semantics<parallel>], iteration_bounds = array<i64: 1>, scalar_prefetch = 1 : i64, scratch_operands = 0 : i64, tpu.core_type = #tpu.core_type<tc>, window_params = [{transform_indices = @transform_0, window_bounds = array<i64: 8, 128>}, {transform_indices = @transform_1, window_bounds = array<i64: 8, 128>}]} {
    %c0 = arith.constant 0 : index
    %0 = memref.load %arg1[%c0] : memref<2xf32, #tpu.memory_space<smem>>
    %c1 = arith.constant 1 : index
    %1 = memref.load %arg1[%c1] : memref<2xf32, #tpu.memory_space<smem>>
    %c0_0 = arith.constant 0 : index
    %c0_1 = arith.constant 0 : index
    %2 = vector.load %arg2[%c0_0, %c0_1] : memref<8x128xf32, #tpu.memory_space<vmem>>, vector<8x128xf32>
    %cst = arith.constant 5.000000e-01 : f32
    %3 = vector.broadcast %cst : f32 to vector<8x128xf32>
    %4 = arith.mulf %3, %2 : vector<8x128xf32>
    %5 = math.tanh %4 : vector<8x128xf32>
    %6 = arith.mulf %5, %5 : vector<8x128xf32>
    %7 = arith.mulf %6, %6 : vector<8x128xf32>
    %8 = vector.broadcast %0 : f32 to vector<8x128xf32>
    %9 = arith.mulf %8, %7 : vector<8x128xf32>
    %cst_2 = arith.constant 8.000000e-01 : f32
    %10 = vector.broadcast %cst_2 : f32 to vector<8x128xf32>
    %11 = arith.addf %10, %9 : vector<8x128xf32>
    %12 = vector.broadcast %1 : f32 to vector<8x128xf32>
    %13 = arith.addf %11, %12 : vector<8x128xf32>
    %14 = vector.broadcast %1 : f32 to vector<8x128xf32>
    %15 = arith.maximumf %13, %14 : vector<8x128xf32>
    %c0_3 = arith.constant 0 : index
    %c0_4 = arith.constant 0 : index
    %16 = vector.load %arg3[%c0_3, %c0_4] : memref<8x128xf32, #tpu.memory_space<vmem>>, vector<8x128xf32>
    tpu.vector_store %arg3[%c0_3, %c0_4], %15 {strides = array<i32>} : memref<8x128xf32, #tpu.memory_space<vmem>>, vector<8x128xf32>,
    return
  }
  func.func @transform_0(%arg0: i32, %arg1: memref<2xf32, #tpu.memory_space<smem>>) -> (i32, i32) {
    %c0_i32 = arith.constant 0 : i32
    %c0_i32_0 = arith.constant 0 : i32
    return %arg0, %c0_i32 : i32, i32
  }
  func.func @transform_1(%arg0: i32, %arg1: memref<2xf32, #tpu.memory_space<smem>>) -> (i32, i32) {
    %c0_i32 = arith.constant 0 : i32
    %c0_i32_0 = arith.constant 0 : i32
    return %arg0, %c0_i32 : i32, i32
  }
}

</mosaic_0001>

<llo_original>
// kernel: contrast_relu_activate.1
$region0: #{contrast_relu_activate.1}
  #allocation0 [shape = 'u32[]', space=smem, size = 0x4, offset = 0x4, fixed_abs, tag = 'smem constant byte address 0x4 - core index']
  #allocation1 [shape = 'u32[144,128]{1,0:T(1,128)}', space=vmem, size = 0x12000, scoped, tag = 'internal scratch']
  #allocation2 [shape = 's32[1]{0}', space=sflag, size = 0x4, scoped, tag = 'scoped memory for contrast_relu_activate.1']
  #allocation3 [shape = 'u8[512]{0}', space=smem, size = 0x200, scoped, tag = 'prefetched SMEM operand 0']
  %s0 = inlined_call_operand.vmem [shape: f32[2], index: 0, kind: input, shape index: {}]
  %s1 = inlined_call_operand.vmem [shape: f32[8,128], index: 1, kind: input, shape index: {}]
  %s2 = inlined_call_operand.hbm [shape: f32[8,128], index: 2, kind: output, shape index: {}]
  %s3 = sld [smem:[#allocation0]]
  $region14: #{contrast_relu_activate.1} parent=0
    _
  %s5 = ssub.s32 1, %s3
  %s6 = scalar_select 0, %s5, %s3
  %s7 = sshll.u32 %s0, 4
  %s8 = int_to_ptr.vmem [resolvable:$true] %s7
  %10 = dma.vmem_to_smem %s8, 16, [#allocation3], [#allocation2]
  %11 = dma.done [#allocation2], 16
  %12 = sfence
  $region1: #{contrast_relu_activate.1} parent=0
    #allocation4 [shape = 'u8[4096]{0}', space=vmem, size = 0x1000, scoped, tag = 'output window, operand 0, single buffered']
    #allocation5 [shape = 's32[1]{0}', space=sflag, size = 0x4, scoped, tag = 'scoped memory for contrast_relu_activate.1']
    %13 = vsyncpa [#allocation5], 0
    // Predicated region
    $region2: #{contrast_relu_activate.1} parent=1 // pred_check
      _
    $region3: #{contrast_relu_activate.1} parent=1 // pred_check_branch
      %15 = sbr.rel (0) target = $region5
    $region4: #{contrast_relu_activate.1} parent=1 // pred_region
      _
    $region5: #{contrast_relu_activate.1} parent=1 // pred_fallthru
      _
    %s16 = sld [smem:[#allocation3]]
    %s17 = sld [smem:[#allocation3 + $0x1]]
    %v18 = vld [vmem:[%s1] sm:$0xff]
    %v19 = vmul.f32 %v18, 0.5
    %v20 = vtanh.pop %v19
    %v21 = vmul.f32 %v20, %v20
    %v22 = vmul.f32 %v21, %v21
    %v23 = vstv %s16
    %v24 = vmul.f32 %v23, %v22
    %v25 = vadd.f32 %v24, 0.8
    %v26 = vstv %s17
    %v27 = vadd.f32 %v25, %v26
    %v28 = vmax.f32 %v27, %v26
    %29 = vst [vmem:[#allocation4] sm:$0xff] %v28
    // Predicated region
    $region6: #{contrast_relu_activate.1} parent=1 // pred_check
      _
    $region7: #{contrast_relu_activate.1} parent=1 // pred_check_branch
      %31 = sbr.rel (0) target = $region9
    $region8: #{contrast_relu_activate.1} parent=1 // pred_region
      %s33 = ssub.s32 128, 128
      %34 = vsyncadd [#allocation5], %s33
      %s36 = sshll.u32 [#allocation4], 4
      %s37 = int_to_ptr.vmem [resolvable:$true] %s36
      %39 = dma.vmem_to_hbm [thread:$0]  %s37, 128, %s2, [#allocation5]
    $region9: #{contrast_relu_activate.1} parent=1 // pred_fallthru
      _
    // Predicated region
    $region10: #{contrast_relu_activate.1} parent=1 // pred_check
      _
    $region11: #{contrast_relu_activate.1} parent=1 // pred_check_branch
      %41 = sbr.rel (0) target = $region13
    $region12: #{contrast_relu_activate.1} parent=1 // pred_region
      %42 = dma.done [#allocation5], 128
    $region13: #{contrast_relu_activate.1} parent=1 // pred_fallthru
      _
    %43 = vsyncpa [#allocation5], 1

</llo_original>
